<compile_context>
chip_gen: v6e
topology: v6e:2x2x1
jax: 0.10.0
libtpu: 0.0.40
codegen_flags: <defaults>
</compile_context>

<pallas_src>
import jax
import jax.numpy as jnp
from jax.experimental import pallas as pl
from jax.experimental.pallas import tpu as pltpu


def dueling_dqn_kernel(x_ref, w1_ref, w2_ref, w3_ref, out_ref):
    # Static sizes from the block shapes.
    S = x_ref.shape[1]            # state_size
    F1 = w1_ref.shape[1]          # fc1_units
    F2x2 = w2_ref.shape[1]        # 2 * fc2_units (advantage | value fused)

    x = x_ref[...]

    # fc1 + relu (bias is the last row of the augmented weight blob).
    h1 = jnp.dot(x, w1_ref[0:S, :], preferred_element_type=jnp.float32)
    h1 = jnp.maximum(h1 + w1_ref[S:S + 1, :], 0.0)
    h1 = h1.astype(w2_ref.dtype)            # bf16 path: feed MXU in weight dtype

    # Fused fc2_advantage | fc2_value + relu -> (B, 2*F2): one 128-lane matmul.
    h2 = jnp.dot(h1, w2_ref[0:F1, :], preferred_element_type=jnp.float32)
    h2 = jnp.maximum(h2 + w2_ref[F1:F1 + 1, :], 0.0)
    h2 = h2.astype(w3_ref.dtype)

    # Fused output layer: the dueling combine is pre-folded into w3, so this
    # matmul + bias row yields Q = V + A - mean_a(A) directly.
    q = jnp.dot(h2, w3_ref[0:F2x2, :], preferred_element_type=jnp.float32)
    q = q + w3_ref[F2x2:F2x2 + 1, :]
    out_ref[...] = q.astype(out_ref.dtype)


def _round_up(n, m):
    return ((n + m - 1) // m) * m


def dueling_dqn_forward(state, fused_params, *, batch_tile=None,
                        single_block_vmem_budget=24 * 1024 * 1024):
    """Run the fused Dueling-DQN forward kernel.

    fused_params: dict with 'w1aug' (S+1, F1), 'w2aug' (F1+1, 2*F2),
                  'w3aug' (2*F2+1, A)  -- dueling combine folded in.
    """
    w1 = fused_params["w1aug"]
    w2 = fused_params["w2aug"]
    w3 = fused_params["w3aug"]
    B, S = state.shape
    F1 = w1.shape[1]
    F2x2 = w2.shape[1]
    A = w3.shape[1]

    # bf16 path: storing x (and weights) in bf16 halves HBM traffic; compute
    # still accumulates in f32 on the MXU.
    x = state.astype(w1.dtype)
    x_bytes = x.dtype.itemsize
    out_bytes = 4                     # Q stays f32

    weight_bytes = sum(int(w.size) * w.dtype.itemsize for w in (w1, w2, w3))
    row_bytes = S * x_bytes + A * out_bytes

    flops = 2 * B * (S * F1 + F1 * F2x2 + F2x2 * A)
    cost = pl.CostEstimate(flops=flops, transcendentals=0,
                           bytes_accessed=B * row_bytes + weight_bytes)

    # ---- single whole-array block: no grid, no per-step overhead -----------
    # Preferred on single-TC chips (v5e/v6e) and whenever the whole problem
    # comfortably fits the scoped VMEM budget (conservative 24 MiB default,
    # safe even against v7x's smaller VMEM).
    if B * row_bytes + weight_bytes <= single_block_vmem_budget:
        vmem = pl.BlockSpec(memory_space=pltpu.MemorySpace.VMEM)
        return pl.pallas_call(
            dueling_dqn_kernel,
            out_shape=jax.ShapeDtypeStruct((B, A), jnp.float32),
            in_specs=[vmem, vmem, vmem, vmem],
            out_specs=vmem,
            cost_estimate=cost,
        )(x, w1, w2, w3)

    # ---- large batch: 1-D "parallel" grid over a padded batch --------------
    if batch_tile is None:
        # >= ~1 MiB of x per tile so the ~0.35 us per-step overhead is <10%.
        batch_tile = max(2048, -(-(1 << 20) // (S * x_bytes)))
    batch_tile = _round_up(int(batch_tile), 8)

    # Pad so the tile count is even (clean 2-TensorCore split on v7x,
    # harmless elsewhere).  Padded rows are computed and then dropped.
    B_pad = _round_up(B, 2 * batch_tile)
    if B_pad != B:
        x = jnp.pad(x, ((0, B_pad - B), (0, 0)))

    # Explicit VMEM budget: double-buffered x/out tiles + (conservatively
    # doubled) weight blobs + slack, clamped well under v7x's 64 MiB physical.
    tile_bytes = 2 * batch_tile * (S * x_bytes + A * out_bytes)
    vmem_limit = int(min(max(tile_bytes + 2 * weight_bytes + (4 << 20),
                             16 << 20), 48 << 20))

    out = pl.pallas_call(
        dueling_dqn_kernel,
        out_shape=jax.ShapeDtypeStruct((B_pad, A), jnp.float32),
        grid=(B_pad // batch_tile,),
        in_specs=[
            pl.BlockSpec((batch_tile, S), lambda i: (i, 0)),
            pl.BlockSpec(w1.shape, lambda i: (0, 0)),   # VMEM-resident weights
            pl.BlockSpec(w2.shape, lambda i: (0, 0)),
            pl.BlockSpec(w3.shape, lambda i: (0, 0)),
        ],
        out_specs=pl.BlockSpec((batch_tile, A), lambda i: (i, 0)),
        compiler_params=pltpu.CompilerParams(
            dimension_semantics=("parallel",),
            vmem_limit_bytes=vmem_limit),
        cost_estimate=cost,
    )(x, w1, w2, w3)
    return out[:B] if B_pad != B else out


def init_params(key, state_size, action_size, fc1_units=64, fc2_units=64,
                dtype=jnp.float32):
    """Deterministic init (uniform, like nn.Linear's default range).

    Returns (raw_params, fused_params): raw per-layer f32 tensors for the
    pure-JAX reference, and the fused/augmented blobs (cast to `dtype`)
    consumed by the kernel.
    """
    def linear(k, fan_in, fan_out):
        kw, kb = jax.random.split(k)
        bound = 1.0 / jnp.sqrt(fan_in)
        w = jax.random.uniform(kw, (fan_in, fan_out), jnp.float32, -bound, bound)
        b = jax.random.uniform(kb, (fan_out,), jnp.float32, -bound, bound)
        return w, b

    k1, k2a, k2v, k3a, k3v = jax.random.split(key, 5)
    w1, b1 = linear(k1, state_size, fc1_units)
    w2a, b2a = linear(k2a, fc1_units, fc2_units)
    w2v, b2v = linear(k2v, fc1_units, fc2_units)
    w3a, b3a = linear(k3a, fc2_units, action_size)
    w3v, b3v = linear(k3v, fc2_units, 1)            # (F2, 1), (1,)

    raw = dict(w1=w1, b1=b1, w2a=w2a, b2a=b2a, w2v=w2v, b2v=b2v,
               w3a=w3a, b3a=b3a, w3v=w3v, b3v=b3v)

    # ---- kernel-side fused / augmented parameters ----
    F2, A = fc2_units, action_size

    # layer 1: bias folded in as an extra sublane row.
    w1aug = jnp.concatenate([w1, b1[None, :]], axis=0)                  # (S+1, F1)

    # layer 2: advantage | value branches fused along the lane axis.
    w2 = jnp.concatenate([w2a, w2v], axis=1)                            # (F1, 2*F2)
    b2 = jnp.concatenate([b2a, b2v], axis=0)                            # (2*F2,)
    w2aug = jnp.concatenate([w2, b2[None, :]], axis=0)                  # (F1+1, 2*F2)

    # layer 3: dueling combine folded into the weights.
    #   Q[:, a] = h2a @ (w3a[:, a] - mean_a(w3a)) + h2v @ w3v
    #             + (b3a[a] - mean(b3a) + b3v)
    w3a_c = w3a - jnp.mean(w3a, axis=1, keepdims=True)                  # (F2, A)
    w3v_b = jnp.broadcast_to(w3v, (F2, A))                              # (F2, A)
    w3q = jnp.concatenate([w3a_c, w3v_b], axis=0)                       # (2*F2, A)
    b3q = b3a - jnp.mean(b3a) + b3v[0]                                  # (A,)
    w3aug = jnp.concatenate([w3q, b3q[None, :]], axis=0)                # (2*F2+1, A)

    fused = dict(w1aug=w1aug.astype(dtype),
                 w2aug=w2aug.astype(dtype),
                 w3aug=w3aug.astype(dtype))
    return raw, fused


def dueling_dqn_ref(state, p):
    """Pure-JAX reference matching the torch module exactly."""
    h1 = jnp.maximum(state @ p["w1"] + p["b1"], 0.0)
    ha = jnp.maximum(h1 @ p["w2a"] + p["b2a"], 0.0)
    hv = jnp.maximum(h1 @ p["w2v"] + p["b2v"], 0.0)
    adv = ha @ p["w3a"] + p["b3a"]
    value = hv @ p["w3v"] + p["b3v"]                 # (B, 1)
    return value + adv - jnp.mean(adv, axis=1, keepdims=True)


if __name__ == "__main__":
    key = jax.random.PRNGKey(0)
    k_param, k_state, k_state2 = jax.random.split(key, 3)

    state_size = 8
    action_size = 4
    batch = 8   # small test shape

    # ---- f32 path (tight check) --------------------------------------------
    raw, fused_f32 = init_params(k_param, state_size, action_size,
                                 fc1_units=64, fc2_units=64, dtype=jnp.float32)
    state = jax.random.normal(k_state, (batch, state_size), jnp.float32)

    q = jax.block_until_ready(dueling_dqn_forward(state, fused_f32))
    q_ref = dueling_dqn_ref(state, raw)
    assert q.shape == (batch, action_size)
    assert jnp.allclose(q, q_ref, atol=1e-4, rtol=1e-4), (q, q_ref)

    # ---- bf16-storage path (relaxed check) ----------------------------------
    _, fused_bf16 = init_params(k_param, state_size, action_size,
                                fc1_units=64, fc2_units=64, dtype=jnp.bfloat16)
    q_bf16 = jax.block_until_ready(dueling_dqn_forward(state, fused_bf16))
    assert q_bf16.shape == (batch, action_size)
    assert jnp.allclose(q_bf16, q_ref, atol=5e-2, rtol=5e-2), (q_bf16, q_ref)

    # ---- exercise the gridded / padded large-batch path cheaply ------------
    B2 = 300  # non-multiple of the tile -> padded to an even tile count
    state2 = jax.random.normal(k_state2, (B2, state_size), jnp.float32)
    q2 = jax.block_until_ready(
        dueling_dqn_forward(state2, fused_f32, batch_tile=128,
                            single_block_vmem_budget=0))
    q2_ref = dueling_dqn_ref(state2, raw)
    assert q2.shape == (B2, action_size)
    assert jnp.allclose(q2, q2_ref, atol=1e-4, rtol=1e-4), (q2, q2_ref)

    print("KERNEL_OK")
</pallas_src>

<mosaic_0001>
module attributes {stable_mosaic.version = 11 : i64} {
  func.func @dueling_dqn_kernel(%arg0: memref<8x8xf32, #tpu.memory_space<vmem>>, %arg1: memref<9x64xf32, #tpu.memory_space<vmem>>, %arg2: memref<65x128xf32, #tpu.memory_space<vmem>>, %arg3: memref<129x4xf32, #tpu.memory_space<vmem>>, %arg4: memref<8x4xf32, #tpu.memory_space<vmem>>) attributes {dimension_semantics = [], scalar_prefetch = 0 : i64, scratch_operands = 0 : i64, tpu.core_type = #tpu.core_type<tc>} {
    %c0 = arith.constant 0 : index
    %c0_0 = arith.constant 0 : index
    %0 = vector.load %arg0[%c0, %c0_0] : memref<8x8xf32, #tpu.memory_space<vmem>>, vector<8x8xf32>
    %c0_1 = arith.constant 0 : index
    %c0_2 = arith.constant 0 : index
    %1 = vector.load %arg1[%c0_1, %c0_2] : memref<9x64xf32, #tpu.memory_space<vmem>>, vector<8x64xf32>
    %cst = arith.constant dense<0.000000e+00> : vector<8x64xf32>
    %2 = tpu.matmul %0, %1, %cst {dimension_numbers = #tpu.dot_dimension_numbers<[1], [0], [0], [1], [0, 0, 1, 1], [], []>} : vector<8x8xf32>, vector<8x64xf32>, vector<8x64xf32> -> vector<8x64xf32>
    %c8 = arith.constant 8 : index
    %c0_3 = arith.constant 0 : index
    %3 = vector.load %arg1[%c8, %c0_3] : memref<9x64xf32, #tpu.memory_space<vmem>>, vector<1x64xf32>
    %4 = vector.broadcast %3 : vector<1x64xf32> to vector<8x64xf32>
    %5 = arith.addf %2, %4 : vector<8x64xf32>
    %cst_4 = arith.constant 0.000000e+00 : f32
    %6 = vector.broadcast %cst_4 : f32 to vector<8x64xf32>
    %7 = arith.maximumf %5, %6 : vector<8x64xf32>
    %c0_5 = arith.constant 0 : index
    %c0_6 = arith.constant 0 : index
    %8 = vector.load %arg2[%c0_5, %c0_6] : memref<65x128xf32, #tpu.memory_space<vmem>>, vector<64x128xf32>
    %cst_7 = arith.constant dense<0.000000e+00> : vector<8x128xf32>
    %9 = tpu.matmul %7, %8, %cst_7 {dimension_numbers = #tpu.dot_dimension_numbers<[1], [0], [0], [1], [0, 0, 1, 1], [], []>} : vector<8x64xf32>, vector<64x128xf32>, vector<8x128xf32> -> vector<8x128xf32>
    %c64 = arith.constant 64 : index
    %c0_8 = arith.constant 0 : index
    %10 = vector.load %arg2[%c64, %c0_8] : memref<65x128xf32, #tpu.memory_space<vmem>>, vector<1x128xf32>
    %11 = vector.broadcast %10 : vector<1x128xf32> to vector<8x128xf32>
    %12 = arith.addf %9, %11 : vector<8x128xf32>
    %cst_9 = arith.constant 0.000000e+00 : f32
    %13 = vector.broadcast %cst_9 : f32 to vector<8x128xf32>
    %14 = arith.maximumf %12, %13 : vector<8x128xf32>
    %c0_10 = arith.constant 0 : index
    %c0_11 = arith.constant 0 : index
    %15 = vector.load %arg3[%c0_10, %c0_11] : memref<129x4xf32, #tpu.memory_space<vmem>>, vector<128x4xf32>
    %cst_12 = arith.constant dense<0.000000e+00> : vector<8x4xf32>
    %16 = tpu.matmul %14, %15, %cst_12 {dimension_numbers = #tpu.dot_dimension_numbers<[1], [0], [0], [1], [0, 0, 1, 1], [], []>} : vector<8x128xf32>, vector<128x4xf32>, vector<8x4xf32> -> vector<8x4xf32>
    %c128 = arith.constant 128 : index
    %c0_13 = arith.constant 0 : index
    %17 = vector.load %arg3[%c128, %c0_13] : memref<129x4xf32, #tpu.memory_space<vmem>>, vector<1x4xf32>
    %18 = vector.broadcast %17 : vector<1x4xf32> to vector<8x4xf32>
    %19 = arith.addf %16, %18 : vector<8x4xf32>
    %c0_14 = arith.constant 0 : index
    %c0_15 = arith.constant 0 : index
    %20 = vector.load %arg4[%c0_14, %c0_15] : memref<8x4xf32, #tpu.memory_space<vmem>>, vector<8x4xf32>
    tpu.vector_store %arg4[%c0_14, %c0_15], %19 {strides = array<i32>} : memref<8x4xf32, #tpu.memory_space<vmem>>, vector<8x4xf32>,
    return
  }
}

</mosaic_0001>

<llo_original>
// kernel: tpu_custom_call.1
$region0: #{tpu_custom_call.1}
  #allocation0 [shape = 'u32[]', space=smem, size = 0x4, offset = 0x4, fixed_abs, tag = 'smem constant byte address 0x4 - core index']
  #allocation1 [shape = 'u32[144,128]{1,0:T(1,128)}', space=vmem, size = 0x12000, scoped, tag = 'internal scratch']
  %s0 = inlined_call_operand.vmem [shape: f32[8,8], index: 0, kind: input, shape index: {}]
  %s1 = inlined_call_operand.vmem [shape: f32[9,64], index: 1, kind: input, shape index: {}]
  %s2 = inlined_call_operand.vmem [shape: f32[65,128], index: 2, kind: input, shape index: {}]
  %s3 = inlined_call_operand.vmem [shape: f32[129,4], index: 3, kind: input, shape index: {}]
  %s4 = inlined_call_operand.vmem [shape: f32[8,4], index: 4, kind: output, shape index: {}]
  %s5 = sld [smem:[#allocation0]]
  $region26: #{tpu_custom_call.1} parent=0
    _
  %s7 = ssub.s32 1, %s5
  %s8 = scalar_select 0, %s7, %s5
  // Predicated region
  $region2: #{tpu_custom_call.1} parent=0 // pred_check
    _
  $region3: #{tpu_custom_call.1} parent=0 // pred_check_branch
    %10 = sbr.rel (0) target = $region5
  $region4: #{tpu_custom_call.1} parent=0 // pred_region
    _
  $region5: #{tpu_custom_call.1} parent=0 // pred_fallthru
    _
  // Predicated region
  $region6: #{tpu_custom_call.1} parent=0 // pred_check
    _
  $region7: #{tpu_custom_call.1} parent=0 // pred_check_branch
    %12 = sbr.rel (0) target = $region9
  $region8: #{tpu_custom_call.1} parent=0 // pred_region
    _
  $region9: #{tpu_custom_call.1} parent=0 // pred_fallthru
    _
  // Predicated region
  $region10: #{tpu_custom_call.1} parent=0 // pred_check
    _
  $region11: #{tpu_custom_call.1} parent=0 // pred_check_branch
    %14 = sbr.rel (0) target = $region13
  $region12: #{tpu_custom_call.1} parent=0 // pred_region
    _
  $region13: #{tpu_custom_call.1} parent=0 // pred_fallthru
    _
  // Predicated region
  $region14: #{tpu_custom_call.1} parent=0 // pred_check
    _
  $region15: #{tpu_custom_call.1} parent=0 // pred_check_branch
    %16 = sbr.rel (0) target = $region17
  $region16: #{tpu_custom_call.1} parent=0 // pred_region
    _
  $region17: #{tpu_custom_call.1} parent=0 // pred_fallthru
    _
  %v17 = vld [vmem:[%s0] sm:$0xff]
  %v18 = vld [vmem:[%s1] sm:$0xff]
  %v19 = vld [vmem:[%s1 + $0x8] sm:$0x1]
  %v20 = vlaneseq
  %v21 = vshrl.u32 %v20, 7
  %v22 = vsub.s32 0, %v21
  %v23 = vrot.slane %v19, %v22
  %vm24 = vcmask 64512
  %v26 = vsel %vm24, %v17, 0
  %28 = vmatprep.subr.mxu0 0.0
  %29 = vmatpush1.msra.mxu0 0.0
  %30 = vmatprep.subr.mxu0 0.0
  %31 = vmatpush1.msra.mxu0 0.0
  %32 = vmatprep.subr.mxu0 0.0
  %33 = vmatpush1.msra.mxu0 0.0
  %34 = vmatprep.subr.mxu0 0.0
  %35 = vmatpush1.msra.mxu0 0.0
  %36 = vmatprep.subr.mxu0 0.0
  %37 = vmatpush1.msra.mxu0 0.0
  %38 = vmatprep.subr.mxu0 0.0
  %39 = vmatpush1.msra.mxu0 0.0
  %40 = vmatprep.subr.mxu0 0.0
  %41 = vmatpush1.msra.mxu0 0.0
  %42 = vmatprep.subr.mxu0 0.0
  %43 = vmatpush1.msra.mxu0 0.0
  %44 = vmatprep.subr.mxu0 0.0
  %45 = vmatpush1.msra.mxu0 0.0
  %46 = vmatprep.subr.mxu0 0.0
  %47 = vmatpush1.msra.mxu0 0.0
  %48 = vmatprep.subr.mxu0 0.0
  %49 = vmatpush1.msra.mxu0 0.0
  %50 = vmatprep.subr.mxu0 0.0
  %51 = vmatpush1.msra.mxu0 0.0
  %52 = vmatprep.subr.mxu0 0.0
  %53 = vmatpush1.msra.mxu0 0.0
  %54 = vmatprep.subr.mxu0 0.0
  %55 = vmatpush1.msra.mxu0 0.0
  %56 = vmatprep.subr.mxu0 0.0
  %57 = vmatpush1.msra.mxu0 0.0
  %58 = vmatprep.subr.mxu0 0.0
  %59 = vmatpush1.msra.mxu0 %v18
  %60 = vmatprep.subr.mxu0 0.0
  %61 = vmatpush2.msra.mxu0 0.0
  %62 = vmatprep.subr.mxu0 0.0
  %63 = vmatpush2.msra.mxu0 0.0
  %64 = vmatprep.subr.mxu0 0.0
  %65 = vmatpush2.msra.mxu0 0.0
  %66 = vmatprep.subr.mxu0 0.0
  %67 = vmatpush2.msra.mxu0 0.0
  %68 = vmatprep.subr.mxu0 0.0
  %69 = vmatpush2.msra.mxu0 0.0
  %70 = vmatprep.subr.mxu0 0.0
  %71 = vmatpush2.msra.mxu0 0.0
  %72 = vmatprep.subr.mxu0 0.0
  %73 = vmatpush2.msra.mxu0 0.0
  %74 = vmatprep.subr.mxu0 0.0
  %75 = vmatpush2.msra.mxu0 0.0
  %76 = vmatprep.subr.mxu0 0.0
  %77 = vmatpush2.msra.mxu0 0.0
  %78 = vmatprep.subr.mxu0 0.0
  %79 = vmatpush2.msra.mxu0 0.0
  %80 = vmatprep.subr.mxu0 0.0
  %81 = vmatpush2.msra.mxu0 0.0
  %82 = vmatprep.subr.mxu0 0.0
  %83 = vmatpush2.msra.mxu0 0.0
  %84 = vmatprep.subr.mxu0 0.0
  %85 = vmatpush2.msra.mxu0 0.0
  %86 = vmatprep.subr.mxu0 0.0
  %87 = vmatpush2.msra.mxu0 0.0
  %88 = vmatprep.subr.mxu0 0.0
  %89 = vmatpush2.msra.mxu0 0.0
  %90 = vmatprep.subr.mxu0 0.0
  %91 = vmatpush2.msra.mxu0 0.0
  %92 = vmatprep.mubr.f32.mxu0 0.0
  %93 = vmatmul.mubr.f32.gmra.mxu0 %v26
  %v94 = vpop.f32.mrf.mxu0
  %v95 = vadd.f32 %v23, %v94
  %v96 = vpop.f32.mrf.mxu0
  %97 = vdwg.mxu0
  %v98 = vmax.f32 %v95, 0.0
  %v99 = vld [vmem:[%s2] sm:$0xff]
  %v100 = vld [vmem:[%s2 + $0x8] sm:$0xff]
  %v101 = vld [vmem:[%s2 + $0x10] sm:$0xff]
  %v102 = vld [vmem:[%s2 + $0x18] sm:$0xff]
  %v103 = vld [vmem:[%s2 + $0x20] sm:$0xff]
  %v104 = vld [vmem:[%s2 + $0x28] sm:$0xff]
  %v105 = vld [vmem:[%s2 + $0x30] sm:$0xff]
  %v106 = vld [vmem:[%s2 + $0x38] sm:$0xff]
  %v107 = vld [vmem:[%s2 + $0x40] sm:$0x1]
  %v108 = vlaneseq
  %v109 = vshrl.u32 %v108, 7
  %v110 = vsub.s32 0, %v109
  %v111 = vrot.slane %v107, %v110
  %vm112 = vcmask 523264
  %v114 = vsel %vm112, %v98, 0
  %116 = vmatprep.subr.mxu0 0.0
  %117 = vmatpush1.msra.mxu0 0.0
  %118 = vmatprep.subr.mxu0 0.0
  %119 = vmatpush1.msra.mxu0 0.0
  %120 = vmatprep.subr.mxu0 0.0
  %121 = vmatpush1.msra.mxu0 0.0
  %122 = vmatprep.subr.mxu0 0.0
  %123 = vmatpush1.msra.mxu0 0.0
  %124 = vmatprep.subr.mxu0 0.0
  %125 = vmatpush1.msra.mxu0 0.0
  %126 = vmatprep.subr.mxu0 0.0
  %127 = vmatpush1.msra.mxu0 0.0
  %128 = vmatprep.subr.mxu0 0.0
  %129 = vmatpush1.msra.mxu0 0.0
  %130 = vmatprep.subr.mxu0 0.0
  %131 = vmatpush1.msra.mxu0 0.0
  %132 = vmatprep.subr.mxu0 0.0
  %133 = vmatpush1.msra.mxu0 %v106
  %134 = vmatprep.subr.mxu0 0.0
  %135 = vmatpush1.msra.mxu0 %v105
  %136 = vmatprep.subr.mxu0 0.0
  %137 = vmatpush1.msra.mxu0 %v104
  %138 = vmatprep.subr.mxu0 0.0
  %139 = vmatpush1.msra.mxu0 %v103
  %140 = vmatprep.subr.mxu0 0.0
  %141 = vmatpush1.msra.mxu0 %v102
  %142 = vmatprep.subr.mxu0 0.0
  %143 = vmatpush1.msra.mxu0 %v101
  %144 = vmatprep.subr.mxu0 0.0
  %145 = vmatpush1.msra.mxu0 %v100
  %146 = vmatprep.subr.mxu0 0.0
  %147 = vmatpush1.msra.mxu0 %v99
  %148 = vmatprep.subr.mxu0 0.0
  %149 = vmatpush2.msra.mxu0 0.0
  %150 = vmatprep.subr.mxu0 0.0
  %151 = vmatpush2.msra.mxu0 0.0
  %152 = vmatprep.subr.mxu0 0.0
  %153 = vmatpush2.msra.mxu0 0.0
  %154 = vmatprep.subr.mxu0 0.0
  %155 = vmatpush2.msra.mxu0 0.0
  %156 = vmatprep.subr.mxu0 0.0
  %157 = vmatpush2.msra.mxu0 0.0
  %158 = vmatprep.subr.mxu0 0.0
  %159 = vmatpush2.msra.mxu0 0.0
  %160 = vmatprep.subr.mxu0 0.0
  %161 = vmatpush2.msra.mxu0 0.0
  %162 = vmatprep.subr.mxu0 0.0
  %163 = vmatpush2.msra.mxu0 0.0
  %164 = vmatprep.subr.mxu0 0.0
  %165 = vmatpush2.msra.mxu0 0.0
  %166 = vmatprep.subr.mxu0 0.0
  %167 = vmatpush2.msra.mxu0 0.0
  %168 = vmatprep.subr.mxu0 0.0
  %169 = vmatpush2.msra.mxu0 0.0
  %170 = vmatprep.subr.mxu0 0.0
  %171 = vmatpush2.msra.mxu0 0.0
  %172 = vmatprep.subr.mxu0 0.0
  %173 = vmatpush2.msra.mxu0 0.0
  %174 = vmatprep.subr.mxu0 0.0
  %175 = vmatpush2.msra.mxu0 0.0
  %176 = vmatprep.subr.mxu0 0.0
  %177 = vmatpush2.msra.mxu0 0.0
  %178 = vmatprep.subr.mxu0 0.0
  %179 = vmatpush2.msra.mxu0 0.0
  %180 = vmatprep.mubr.f32.mxu0 0.0
  %181 = vmatmul.mubr.f32.gmra.mxu0 %v114
  %v182 = vpop.f32.mrf.mxu0
  %v183 = vadd.f32 %v111, %v182
  %v184 = vpop.f32.mrf.mxu0
  %185 = vdwg.mxu0
  %v186 = vmax.f32 %v183, 0.0
  %v187 = vld [vmem:[%s3] sm:$0xff]
  %v188 = vld [vmem:[%s3 + $0x8] sm:$0xff]
  %v189 = vld [vmem:[%s3 + $0x10] sm:$0xff]
  %v190 = vld [vmem:[%s3 + $0x18] sm:$0xff]
  %v191 = vld [vmem:[%s3 + $0x20] sm:$0xff]
  %v192 = vld [vmem:[%s3 + $0x28] sm:$0xff]
  %v193 = vld [vmem:[%s3 + $0x30] sm:$0xff]
  %v194 = vld [vmem:[%s3 + $0x38] sm:$0xff]
  %v195 = vld [vmem:[%s3 + $0x40] sm:$0xff]
  %v196 = vld [vmem:[%s3 + $0x48] sm:$0xff]
  %v197 = vld [vmem:[%s3 + $0x50] sm:$0xff]
  %v198 = vld [vmem:[%s3 + $0x58] sm:$0xff]
  %v199 = vld [vmem:[%s3 + $0x60] sm:$0xff]
  %v200 = vld [vmem:[%s3 + $0x68] sm:$0xff]
  %v201 = vld [vmem:[%s3 + $0x70] sm:$0xff]
  %v202 = vld [vmem:[%s3 + $0x78] sm:$0xff]
  %v203 = vld [vmem:[%s3 + $0x80] sm:$0x1]
  %v204 = vlaneseq
  %v205 = vshrl.u32 %v204, 7
  %v206 = vsub.s32 0, %v205
  %v207 = vrot.slane %v203, %v206
  %208 = vmatprep.subr.mxu0 0.0
  %209 = vmatpush1.msra.mxu0 %v202
  %210 = vmatprep.subr.mxu0 0.0
  %211 = vmatpush1.msra.mxu0 %v201
  %212 = vmatprep.subr.mxu0 0.0
  %213 = vmatpush1.msra.mxu0 %v200
  %214 = vmatprep.subr.mxu0 0.0
  %215 = vmatpush1.msra.mxu0 %v199
  %216 = vmatprep.subr.mxu0 0.0
  %217 = vmatpush1.msra.mxu0 %v198
  %218 = vmatprep.subr.mxu0 0.0
  %219 = vmatpush1.msra.mxu0 %v197
  %220 = vmatprep.subr.mxu0 0.0
  %221 = vmatpush1.msra.mxu0 %v196
  %222 = vmatprep.subr.mxu0 0.0
  %223 = vmatpush1.msra.mxu0 %v195
  %224 = vmatprep.subr.mxu0 0.0
  %225 = vmatpush1.msra.mxu0 %v194
  %226 = vmatprep.subr.mxu0 0.0
  %227 = vmatpush1.msra.mxu0 %v193
  %228 = vmatprep.subr.mxu0 0.0
  %229 = vmatpush1.msra.mxu0 %v192
  %230 = vmatprep.subr.mxu0 0.0
  %231 = vmatpush1.msra.mxu0 %v191
  %232 = vmatprep.subr.mxu0 0.0
  %233 = vmatpush1.msra.mxu0 %v190
  %234 = vmatprep.subr.mxu0 0.0
  %235 = vmatpush1.msra.mxu0 %v189
  %236 = vmatprep.subr.mxu0 0.0
  %237 = vmatpush1.msra.mxu0 %v188
  %238 = vmatprep.subr.mxu0 0.0
  %239 = vmatpush1.msra.mxu0 %v187
  %240 = vmatprep.subr.mxu0 0.0
  %241 = vmatpush2.msra.mxu0 0.0
  %242 = vmatprep.subr.mxu0 0.0
  %243 = vmatpush2.msra.mxu0 0.0
  %244 = vmatprep.subr.mxu0 0.0
  %245 = vmatpush2.msra.mxu0 0.0
  %246 = vmatprep.subr.mxu0 0.0
  %247 = vmatpush2.msra.mxu0 0.0
  %248 = vmatprep.subr.mxu0 0.0
  %249 = vmatpush2.msra.mxu0 0.0
  %250 = vmatprep.subr.mxu0 0.0
  %251 = vmatpush2.msra.mxu0 0.0
  %252 = vmatprep.subr.mxu0 0.0
  %253 = vmatpush2.msra.mxu0 0.0
  %254 = vmatprep.subr.mxu0 0.0
  %255 = vmatpush2.msra.mxu0 0.0
  %256 = vmatprep.subr.mxu0 0.0
  %257 = vmatpush2.msra.mxu0 0.0
  %258 = vmatprep.subr.mxu0 0.0
  %259 = vmatpush2.msra.mxu0 0.0
  %260 = vmatprep.subr.mxu0 0.0
  %261 = vmatpush2.msra.mxu0 0.0
  %262 = vmatprep.subr.mxu0 0.0
  %263 = vmatpush2.msra.mxu0 0.0
  %264 = vmatprep.subr.mxu0 0.0
  %265 = vmatpush2.msra.mxu0 0.0
  %266 = vmatprep.subr.mxu0 0.0
  %267 = vmatpush2.msra.mxu0 0.0
  %268 = vmatprep.subr.mxu0 0.0
  %269 = vmatpush2.msra.mxu0 0.0
  %270 = vmatprep.subr.mxu0 0.0
  %271 = vmatpush2.msra.mxu0 0.0
  %272 = vmatprep.mubr.f32.mxu0 0.0
  %273 = vmatmul.mubr.f32.gmra.mxu0 %v186
  %v274 = vpop.f32.mrf.mxu0
  %v275 = vadd.f32 %v207, %v274
  %v276 = vpop.f32.mrf.mxu0
  %277 = vdwg.mxu0
  %vm278 = vcmask 31744
  %279 = vst.msk [vmem:[%s4] sm:$0xff] %vm278, %v275
  // Predicated region
  $region18: #{tpu_custom_call.1} parent=0 // pred_check
    _
  $region19: #{tpu_custom_call.1} parent=0 // pred_check_branch
    %281 = sbr.rel (0) target = $region21
  $region20: #{tpu_custom_call.1} parent=0 // pred_region
    _
  $region21: #{tpu_custom_call.1} parent=0 // pred_fallthru
    _
  // Predicated region
  $region22: #{tpu_custom_call.1} parent=0 // pred_check
    _
  $region23: #{tpu_custom_call.1} parent=0 // pred_check_branch
    %283 = sbr.rel (0) target = $region25
  $region24: #{tpu_custom_call.1} parent=0 // pred_region
    _
  $region25: #{tpu_custom_call.1} parent=0 // pred_fallthru
    _

</llo_original>
